<compile_context>
chip_gen: v7x
topology: tpu7x:2x2x1
jax: 0.10.0
libtpu: 0.0.40
codegen_flags: <defaults>
</compile_context>

<pallas_src>
import functools
import math

import jax
import jax.numpy as jnp
import numpy as np
from jax.experimental import pallas as pl
from jax.experimental.pallas import tpu as pltpu


def _geometry(window_size, window_stride, window_dilation, t):
    pad = (window_size + (window_size - 1) * (window_dilation - 1) - 1) // 2
    t_out = (t + 2 * pad - window_dilation * (window_size - 1) - 1) // window_stride + 1
    return pad, t_out


def _unfold_kernel(x_ref, o_ref, *, window_size, window_dilation,
                   window_stride, pad, t_in, t_out, v):
    """One grid step: unfold a (C_blk, T, V) tile into (C_blk, T_out, W*V).

    x_ref: (C_blk, T, V)         un-padded input channels
    o_ref: (C_blk, T_out, W*V)   unfolded output tile

    No staging scratch: window plane w is written directly into its lane
    slice, read from x_ref (strided read when window_stride > 1); the few
    boundary rows that fall in the zero padding are written as zeros.
    """
    c_blk = x_ref.shape[0]
    dt = o_ref.dtype

    for w in range(window_size):
        off = w * window_dilation - pad           # src frame = t*stride + off
        lane = slice(w * v, (w + 1) * v)

        # Valid output rows t satisfy 0 <= t*stride + off <= t_in - 1.
        if off < 0:
            t_lo = (-off + window_stride - 1) // window_stride
        else:
            t_lo = 0
        if t_in - 1 - off >= 0:
            t_hi = (t_in - 1 - off) // window_stride + 1
        else:
            t_hi = 0
        t_lo = min(t_lo, t_out)
        t_hi = max(t_lo, min(t_hi, t_out))
        n_valid = t_hi - t_lo

        if t_lo > 0:                              # leading zero-padded rows
            o_ref[:, :t_lo, lane] = jnp.zeros((c_blk, t_lo, v), dt)
        if n_valid > 0:
            src = t_lo * window_stride + off      # static, >= 0 by construction
            if window_stride == 1:
                o_ref[:, t_lo:t_hi, lane] = x_ref[:, src:src + n_valid, :]
            else:
                o_ref[:, t_lo:t_hi, lane] = x_ref[
                    :, pl.ds(src, n_valid, stride=window_stride), :]
        if t_hi < t_out:                          # trailing zero-padded rows
            o_ref[:, t_hi:, lane] = jnp.zeros((c_blk, t_out - t_hi, v), dt)


def _padded_tile_elems(rows, cols):
    # VMEM footprint of a 2-D (sublane, lane) tile is padded to (8, 128).
    return (math.ceil(rows / 8) * 8) * (math.ceil(cols / 128) * 128)


def _default_vmem_limit_bytes():
    cap = None
    try:
        info = pltpu.get_tpu_info()
        cap = getattr(info, "vmem_capacity_bytes", None)
    except Exception:
        cap = None
    if cap is None or cap <= 64 * 1024 * 1024:
        return 48 * 1024 * 1024        # v7x (64 MiB physical): leave headroom
    return 100 * 1024 * 1024           # v5e / v6e (128 MiB physical)


def unfold_temporal_windows(x, window_size, window_stride, window_dilation=1,
                            *, block_channels=None, vmem_limit_bytes=None):
    """Pallas implementation of UnfoldTemporalWindows.forward.

    x: (N, C, T, V) -> (N, C, T_out, window_size * V).  Dtype-generic: pass
    bf16 input to halve the (write-dominated) HBM traffic if the downstream
    GCN matmul runs in bf16.
    """
    N, C, T, V = x.shape
    pad, T_out = _geometry(window_size, window_stride, window_dilation, T)
    NC = N * C
    WV = window_size * V

    if vmem_limit_bytes is None:
        vmem_limit_bytes = _default_vmem_limit_bytes()

    itemsize = np.dtype(x.dtype).itemsize
    # Double-buffered input + output tiles (no staging scratch anymore).
    per_channel_bytes = (
        2 * _padded_tile_elems(T, V) + 2 * _padded_tile_elems(T_out, WV)
    ) * itemsize

    if block_channels is None:
        budget = int(vmem_limit_bytes * 0.75)      # headroom for compiler temps
        cap = max(1, budget // per_channel_bytes)  # bytes-based, no 128 cap
        cap = int(min(cap, NC))
        if cap >= 8:
            cap = (cap // 8) * 8                   # sublane-friendly DMA shapes
        nblocks = pl.cdiv(NC, cap)
        if nblocks > 1 and nblocks % 2:
            nblocks += 1                           # even #blocks -> both v7x TCs busy
        block_channels = pl.cdiv(NC, nblocks)
    c_blk = int(max(1, min(block_channels, NC)))
    grid = (pl.cdiv(NC, c_blk),)

    x2 = x.reshape(NC, T, V)                       # metadata-only reshape

    kernel = functools.partial(
        _unfold_kernel,
        window_size=window_size,
        window_dilation=window_dilation,
        window_stride=window_stride,
        pad=pad,
        t_in=T,
        t_out=T_out,
        v=V,
    )

    # TODO(synk): highest-value follow-up is to fuse this unfold into the
    # downstream MS-GCN matmul (express the temporal-window gather through the
    # consumer's LHS BlockSpec / in-kernel slicing), or expose a window-major
    # (W, N*C, T_out*V) lane-dense layout, so the W-times-larger unfolded
    # tensor never hits HBM in this padded-lane layout.
    out = pl.pallas_call(
        kernel,
        out_shape=jax.ShapeDtypeStruct((NC, T_out, WV), x.dtype),
        grid_spec=pltpu.PrefetchScalarGridSpec(
            num_scalar_prefetch=0,
            grid=grid,
            in_specs=[pl.BlockSpec((c_blk, T, V), lambda i: (i, 0, 0))],
            out_specs=pl.BlockSpec((c_blk, T_out, WV), lambda i: (i, 0, 0)),
        ),
        compiler_params=pltpu.CompilerParams(
            # TODO(synk): if a v7x profile shows only one TC issuing DMAs,
            # switch to pltpu.CORE_PARALLEL / an explicit core axis.
            dimension_semantics=("parallel",),
            vmem_limit_bytes=int(vmem_limit_bytes),
        ),
    )(x2)
    return out.reshape(N, C, T_out, WV)


def _reference(x, window_size, window_stride, window_dilation=1):
    """Pure-JAX reference reproducing nn.Unfold + reshape/permute semantics."""
    N, C, T, V = x.shape
    pad, T_out = _geometry(window_size, window_stride, window_dilation, T)
    x_pad = jnp.pad(x, ((0, 0), (0, 0), (pad, pad), (0, 0)))
    rows = []
    for t in range(T_out):
        s = t * window_stride
        win = x_pad[:, :, s:s + window_dilation * (window_size - 1) + 1:window_dilation, :]
        rows.append(win.reshape(N, C, 1, window_size * V))
    return jnp.concatenate(rows, axis=2)


if __name__ == "__main__":
    # Small deterministic input: (N, C, T, V) = (2, 4, 16, 16)
    key = jax.random.PRNGKey(0)
    x = jax.random.normal(key, (2, 4, 16, 16), dtype=jnp.float32)

    # (window_size, window_stride, window_dilation): first config is the
    # standard MS-G3D setting; the others exercise dilation, the strided
    # pl.ds path, and multi-row zero boundaries.
    configs = [(3, 1, 1), (3, 1, 2), (3, 2, 1), (5, 1, 1)]
    for (W, S, D) in configs:
        out = unfold_temporal_windows(x, W, S, D)
        out = jax.block_until_ready(out)
        ref = _reference(x, W, S, D)
        assert out.shape == ref.shape, (W, S, D, out.shape, ref.shape)
        np.testing.assert_allclose(np.asarray(out), np.asarray(ref), rtol=0, atol=0)

    print("KERNEL_OK")
</pallas_src>

<mosaic_0001>
module attributes {stable_mosaic.version = 11 : i64} {
  func.func @_unfold_kernel(%arg0: i32, %arg1: memref<8x16x16xf32, #tpu.memory_space<vmem>>, %arg2: memref<8x16x48xf32, #tpu.memory_space<vmem>>) attributes {dimension_semantics = [#tpu.dimension_semantics<parallel>], iteration_bounds = array<i64: 1>, scalar_prefetch = 0 : i64, scratch_operands = 0 : i64, tpu.core_type = #tpu.core_type<tc>, window_params = [{transform_indices = @transform_0, window_bounds = array<i64: 8, 16, 16>}, {transform_indices = @transform_1, window_bounds = array<i64: 8, 16, 48>}]} {
    %cst = arith.constant 0.000000e+00 : f32
    %0 = vector.broadcast %cst : f32 to vector<8x1x16xf32>
    %c0 = arith.constant 0 : index
    %c0_0 = arith.constant 0 : index
    %c0_1 = arith.constant 0 : index
    %1 = vector.load %arg2[%c0, %c0_0, %c0_1] : memref<8x16x48xf32, #tpu.memory_space<vmem>>, vector<8x1x16xf32>
    tpu.vector_store %arg2[%c0, %c0_0, %c0_1], %0 {strides = array<i32>} : memref<8x16x48xf32, #tpu.memory_space<vmem>>, vector<8x1x16xf32>,
    %c0_2 = arith.constant 0 : index
    %c0_3 = arith.constant 0 : index
    %c0_4 = arith.constant 0 : index
    %2 = vector.load %arg1[%c0_2, %c0_3, %c0_4] : memref<8x16x16xf32, #tpu.memory_space<vmem>>, vector<8x15x16xf32>
    %c0_5 = arith.constant 0 : index
    %c1 = arith.constant 1 : index
    %c0_6 = arith.constant 0 : index
    %3 = vector.load %arg2[%c0_5, %c1, %c0_6] : memref<8x16x48xf32, #tpu.memory_space<vmem>>, vector<8x15x16xf32>
    tpu.vector_store %arg2[%c0_5, %c1, %c0_6], %2 {strides = array<i32>} : memref<8x16x48xf32, #tpu.memory_space<vmem>>, vector<8x15x16xf32>,
    %c0_7 = arith.constant 0 : index
    %c0_8 = arith.constant 0 : index
    %c0_9 = arith.constant 0 : index
    %4 = vector.load %arg1[%c0_7, %c0_8, %c0_9] : memref<8x16x16xf32, #tpu.memory_space<vmem>>, vector<8x16x16xf32>
    %c0_10 = arith.constant 0 : index
    %c0_11 = arith.constant 0 : index
    %c16 = arith.constant 16 : index
    %5 = vector.load %arg2[%c0_10, %c0_11, %c16] : memref<8x16x48xf32, #tpu.memory_space<vmem>>, vector<8x16x16xf32>
    tpu.vector_store %arg2[%c0_10, %c0_11, %c16], %4 {strides = array<i32>} : memref<8x16x48xf32, #tpu.memory_space<vmem>>, vector<8x16x16xf32>,
    %c0_12 = arith.constant 0 : index
    %c1_13 = arith.constant 1 : index
    %c0_14 = arith.constant 0 : index
    %6 = vector.load %arg1[%c0_12, %c1_13, %c0_14] : memref<8x16x16xf32, #tpu.memory_space<vmem>>, vector<8x15x16xf32>
    %c0_15 = arith.constant 0 : index
    %c0_16 = arith.constant 0 : index
    %c32 = arith.constant 32 : index
    %7 = vector.load %arg2[%c0_15, %c0_16, %c32] : memref<8x16x48xf32, #tpu.memory_space<vmem>>, vector<8x15x16xf32>
    tpu.vector_store %arg2[%c0_15, %c0_16, %c32], %6 {strides = array<i32>} : memref<8x16x48xf32, #tpu.memory_space<vmem>>, vector<8x15x16xf32>,
    %cst_17 = arith.constant 0.000000e+00 : f32
    %8 = vector.broadcast %cst_17 : f32 to vector<8x1x16xf32>
    %c0_18 = arith.constant 0 : index
    %c15 = arith.constant 15 : index
    %c32_19 = arith.constant 32 : index
    %9 = vector.load %arg2[%c0_18, %c15, %c32_19] : memref<8x16x48xf32, #tpu.memory_space<vmem>>, vector<8x1x16xf32>
    tpu.vector_store %arg2[%c0_18, %c15, %c32_19], %8 {strides = array<i32>} : memref<8x16x48xf32, #tpu.memory_space<vmem>>, vector<8x1x16xf32>,
    return
  }
  func.func @transform_0(%arg0: i32) -> (i32, i32, i32) {
    %c0_i32 = arith.constant 0 : i32
    %c0_i32_0 = arith.constant 0 : i32
    %c0_i32_1 = arith.constant 0 : i32
    return %arg0, %c0_i32, %c0_i32_0 : i32, i32, i32
  }
  func.func @transform_1(%arg0: i32) -> (i32, i32, i32) {
    %c0_i32 = arith.constant 0 : i32
    %c0_i32_0 = arith.constant 0 : i32
    %c0_i32_1 = arith.constant 0 : i32
    return %arg0, %c0_i32, %c0_i32_0 : i32, i32, i32
  }
}

</mosaic_0001>

<llo_original>
// kernel: tpu_custom_call.1
$region0: #{tpu_custom_call.1}
  #allocation0 [shape = 'u32[]', space=smem, size = 0x4, offset = 0x4, fixed_abs, tag = 'smem constant byte address 0x4 - core index']
  #allocation1 [shape = 'u32[144,128]{1,0:T(1,128)}', space=vmem, size = 0x12000, scoped, tag = 'internal scratch']
  %s0 = inlined_call_operand.hbm [shape: f32[8,16,16], index: 0, kind: input, shape index: {}]
  %s1 = inlined_call_operand.hbm [shape: f32[8,16,48], index: 1, kind: output, shape index: {}]
  %s2 = sld [smem:[#allocation0]]
  $region18: #{tpu_custom_call.1} parent=0
    _
  %s4 = ssub.s32 1, %s2
  %s5 = scalar_select 0, %s4, %s2
  $region1: #{tpu_custom_call.1} parent=0
    #allocation2 [shape = 'u8[65536]{0}', space=vmem, size = 0x10000, scoped, tag = 'input window, operand 0, single buffered']
    #allocation3 [shape = 's32[1]{0}', space=sflag, size = 0x4, scoped, tag = 'scoped memory for tpu_custom_call.1']
    #allocation4 [shape = 's32[1]{0}', space=sflag, size = 0x4, scoped, tag = 'scoped memory for tpu_custom_call.1']
    #allocation5 [shape = 'u8[65536]{0}', space=vmem, size = 0x10000, scoped, tag = 'output window, operand 0, single buffered']
    %6 = vsyncpa [#allocation3], 0
    %7 = vsyncpa [#allocation4], 0
    // Predicated region
    $region2: #{tpu_custom_call.1} parent=1 // pred_check
      _
    $region3: #{tpu_custom_call.1} parent=1 // pred_check_branch
      %9 = sbr.rel (0) target = $region5
    $region4: #{tpu_custom_call.1} parent=1 // pred_region
      %s11 = ssub.s32 2048, 2048
      %12 = vsyncadd [#allocation3], %s11
      %s13 = sshll.u32 [#allocation2], 4
      %s14 = int_to_ptr.vmem [resolvable:$true] %s13
      %19 = dma.hbm_to_vmem [thread:$0]  %s0, 2048, %s14, [#allocation3], 128, 128, 8
    $region5: #{tpu_custom_call.1} parent=1 // pred_fallthru
      _
    // Predicated region
    $region6: #{tpu_custom_call.1} parent=1 // pred_check
      _
    $region7: #{tpu_custom_call.1} parent=1 // pred_check_branch
      %21 = sbr.rel (0) target = $region9
    $region8: #{tpu_custom_call.1} parent=1 // pred_region
      %22 = dma.done [#allocation3], 2048
    $region9: #{tpu_custom_call.1} parent=1 // pred_fallthru
      _
    %vm23 = vcmask 122880
    %24 = vst.msk [vmem:[#allocation5] sm:$0x1] %vm23, 0.0
    %25 = vst.msk [vmem:[#allocation5 + $0x10] sm:$0x1] %vm23, 0.0
    %26 = vst.msk [vmem:[#allocation5 + $0x20] sm:$0x1] %vm23, 0.0
    %27 = vst.msk [vmem:[#allocation5 + $0x30] sm:$0x1] %vm23, 0.0
    %28 = vst.msk [vmem:[#allocation5 + $0x40] sm:$0x1] %vm23, 0.0
    %29 = vst.msk [vmem:[#allocation5 + $0x50] sm:$0x1] %vm23, 0.0
    %30 = vst.msk [vmem:[#allocation5 + $0x60] sm:$0x1] %vm23, 0.0
    %31 = vst.msk [vmem:[#allocation5 + $0x70] sm:$0x1] %vm23, 0.0
    %v32 = vld [vmem:[#allocation2] sm:$0xff]
    %v33 = vld [vmem:[#allocation2 + $0x8] sm:$0x7f]
    %v34 = vld [vmem:[#allocation2 + $0x10] sm:$0xff]
    %v35 = vld [vmem:[#allocation2 + $0x18] sm:$0x7f]
    %v36 = vld [vmem:[#allocation2 + $0x20] sm:$0xff]
    %v37 = vld [vmem:[#allocation2 + $0x28] sm:$0x7f]
    %v38 = vld [vmem:[#allocation2 + $0x30] sm:$0xff]
    %v39 = vld [vmem:[#allocation2 + $0x38] sm:$0x7f]
    %v40 = vld [vmem:[#allocation2 + $0x40] sm:$0xff]
    %v41 = vld [vmem:[#allocation2 + $0x48] sm:$0x7f]
    %v42 = vld [vmem:[#allocation2 + $0x50] sm:$0xff]
    %v43 = vld [vmem:[#allocation2 + $0x58] sm:$0x7f]
    %v44 = vld [vmem:[#allocation2 + $0x60] sm:$0xff]
    %v45 = vld [vmem:[#allocation2 + $0x68] sm:$0x7f]
    %v46 = vld [vmem:[#allocation2 + $0x70] sm:$0xff]
    %v47 = vld [vmem:[#allocation2 + $0x78] sm:$0x7f]
    %vm48 = vcmask 130048
    %49 = vst.msk [vmem:[#allocation5 + $0x1] sm:$0xff] %vm48, %v32
    %vm50 = vcmask 129024
    %51 = vst.msk [vmem:[#allocation5 + $0x9] sm:$0x7f] %vm50, %v33
    %52 = vst.msk [vmem:[#allocation5 + $0x11] sm:$0xff] %vm48, %v34
    %53 = vst.msk [vmem:[#allocation5 + $0x19] sm:$0x7f] %vm50, %v35
    %54 = vst.msk [vmem:[#allocation5 + $0x21] sm:$0xff] %vm48, %v36
    %55 = vst.msk [vmem:[#allocation5 + $0x29] sm:$0x7f] %vm50, %v37
    %56 = vst.msk [vmem:[#allocation5 + $0x31] sm:$0xff] %vm48, %v38
    %57 = vst.msk [vmem:[#allocation5 + $0x39] sm:$0x7f] %vm50, %v39
    %58 = vst.msk [vmem:[#allocation5 + $0x41] sm:$0xff] %vm48, %v40
    %59 = vst.msk [vmem:[#allocation5 + $0x49] sm:$0x7f] %vm50, %v41
    %60 = vst.msk [vmem:[#allocation5 + $0x51] sm:$0xff] %vm48, %v42
    %61 = vst.msk [vmem:[#allocation5 + $0x59] sm:$0x7f] %vm50, %v43
    %62 = vst.msk [vmem:[#allocation5 + $0x61] sm:$0xff] %vm48, %v44
    %63 = vst.msk [vmem:[#allocation5 + $0x69] sm:$0x7f] %vm50, %v45
    %64 = vst.msk [vmem:[#allocation5 + $0x71] sm:$0xff] %vm48, %v46
    %65 = vst.msk [vmem:[#allocation5 + $0x79] sm:$0x7f] %vm50, %v47
    %v66 = vld [vmem:[#allocation2] sm:$0xff]
    %v67 = vld [vmem:[#allocation2 + $0x8] sm:$0xff]
    %v68 = vld [vmem:[#allocation2 + $0x10] sm:$0xff]
    %v69 = vld [vmem:[#allocation2 + $0x18] sm:$0xff]
    %v70 = vld [vmem:[#allocation2 + $0x20] sm:$0xff]
    %v71 = vld [vmem:[#allocation2 + $0x28] sm:$0xff]
    %v72 = vld [vmem:[#allocation2 + $0x30] sm:$0xff]
    %v73 = vld [vmem:[#allocation2 + $0x38] sm:$0xff]
    %v74 = vld [vmem:[#allocation2 + $0x40] sm:$0xff]
    %v75 = vld [vmem:[#allocation2 + $0x48] sm:$0xff]
    %v76 = vld [vmem:[#allocation2 + $0x50] sm:$0xff]
    %v77 = vld [vmem:[#allocation2 + $0x58] sm:$0xff]
    %v78 = vld [vmem:[#allocation2 + $0x60] sm:$0xff]
    %v79 = vld [vmem:[#allocation2 + $0x68] sm:$0xff]
    %v80 = vld [vmem:[#allocation2 + $0x70] sm:$0xff]
    %v81 = vld [vmem:[#allocation2 + $0x78] sm:$0xff]
    %98 = vrot.lane.b32.xlu0 %v66, 16
    %v99 = vpop.permute.xlu0 %98
    %100 = vrot.lane.b32.xlu0 %v67, 16
    %v101 = vpop.permute.xlu0 %100
    %102 = vrot.lane.b32.xlu0 %v68, 16
    %v103 = vpop.permute.xlu0 %102
    %104 = vrot.lane.b32.xlu0 %v69, 16
    %v105 = vpop.permute.xlu0 %104
    %106 = vrot.lane.b32.xlu0 %v70, 16
    %v107 = vpop.permute.xlu0 %106
    %108 = vrot.lane.b32.xlu0 %v71, 16
    %v109 = vpop.permute.xlu0 %108
    %110 = vrot.lane.b32.xlu0 %v72, 16
    %v111 = vpop.permute.xlu0 %110
    %112 = vrot.lane.b32.xlu0 %v73, 16
    %v113 = vpop.permute.xlu0 %112
    %114 = vrot.lane.b32.xlu0 %v74, 16
    %v115 = vpop.permute.xlu0 %114
    %116 = vrot.lane.b32.xlu0 %v75, 16
    %v117 = vpop.permute.xlu0 %116
    %118 = vrot.lane.b32.xlu0 %v76, 16
    %v119 = vpop.permute.xlu0 %118
    %120 = vrot.lane.b32.xlu0 %v77, 16
    %v121 = vpop.permute.xlu0 %120
    %122 = vrot.lane.b32.xlu0 %v78, 16
    %v123 = vpop.permute.xlu0 %122
    %124 = vrot.lane.b32.xlu0 %v79, 16
    %v125 = vpop.permute.xlu0 %124
    %126 = vrot.lane.b32.xlu0 %v80, 16
    %v127 = vpop.permute.xlu0 %126
    %128 = vrot.lane.b32.xlu0 %v81, 16
    %v129 = vpop.permute.xlu0 %128
    %vm146 = vcmask 261248
    %147 = vst.msk [vmem:[#allocation5] sm:$0xff] %vm146, %v99
    %148 = vst.msk [vmem:[#allocation5 + $0x8] sm:$0xff] %vm146, %v101
    %149 = vst.msk [vmem:[#allocation5 + $0x10] sm:$0xff] %vm146, %v103
    %150 = vst.msk [vmem:[#allocation5 + $0x18] sm:$0xff] %vm146, %v105
    %151 = vst.msk [vmem:[#allocation5 + $0x20] sm:$0xff] %vm146, %v107
    %152 = vst.msk [vmem:[#allocation5 + $0x28] sm:$0xff] %vm146, %v109
    %153 = vst.msk [vmem:[#allocation5 + $0x30] sm:$0xff] %vm146, %v111
    %154 = vst.msk [vmem:[#allocation5 + $0x38] sm:$0xff] %vm146, %v113
    %155 = vst.msk [vmem:[#allocation5 + $0x40] sm:$0xff] %vm146, %v115
    %156 = vst.msk [vmem:[#allocation5 + $0x48] sm:$0xff] %vm146, %v117
    %157 = vst.msk [vmem:[#allocation5 + $0x50] sm:$0xff] %vm146, %v119
    %158 = vst.msk [vmem:[#allocation5 + $0x58] sm:$0xff] %vm146, %v121
    %159 = vst.msk [vmem:[#allocation5 + $0x60] sm:$0xff] %vm146, %v123
    %160 = vst.msk [vmem:[#allocation5 + $0x68] sm:$0xff] %vm146, %v125
    %161 = vst.msk [vmem:[#allocation5 + $0x70] sm:$0xff] %vm146, %v127
    %162 = vst.msk [vmem:[#allocation5 + $0x78] sm:$0xff] %vm146, %v129
    %v163 = vld [vmem:[#allocation2 + $0x1] sm:$0xff]
    %v164 = vld [vmem:[#allocation2 + $0x9] sm:$0x7f]
    %v165 = vld [vmem:[#allocation2 + $0x11] sm:$0xff]
    %v166 = vld [vmem:[#allocation2 + $0x19] sm:$0x7f]
    %v167 = vld [vmem:[#allocation2 + $0x21] sm:$0xff]
    %v168 = vld [vmem:[#allocation2 + $0x29] sm:$0x7f]
    %v169 = vld [vmem:[#allocation2 + $0x31] sm:$0xff]
    %v170 = vld [vmem:[#allocation2 + $0x39] sm:$0x7f]
    %v171 = vld [vmem:[#allocation2 + $0x41] sm:$0xff]
    %v172 = vld [vmem:[#allocation2 + $0x49] sm:$0x7f]
    %v173 = vld [vmem:[#allocation2 + $0x51] sm:$0xff]
    %v174 = vld [vmem:[#allocation2 + $0x59] sm:$0x7f]
    %v175 = vld [vmem:[#allocation2 + $0x61] sm:$0xff]
    %v176 = vld [vmem:[#allocation2 + $0x69] sm:$0x7f]
    %v177 = vld [vmem:[#allocation2 + $0x71] sm:$0xff]
    %v178 = vld [vmem:[#allocation2 + $0x79] sm:$0x7f]
    %195 = vrot.lane.b32.xlu0 %v163, 32
    %v196 = vpop.permute.xlu0 %195
    %197 = vrot.lane.b32.xlu0 %v164, 32
    %v198 = vpop.permute.xlu0 %197
    %199 = vrot.lane.b32.xlu0 %v165, 32
    %v200 = vpop.permute.xlu0 %199
    %201 = vrot.lane.b32.xlu0 %v166, 32
    %v202 = vpop.permute.xlu0 %201
    %203 = vrot.lane.b32.xlu0 %v167, 32
    %v204 = vpop.permute.xlu0 %203
    %205 = vrot.lane.b32.xlu0 %v168, 32
    %v206 = vpop.permute.xlu0 %205
    %207 = vrot.lane.b32.xlu0 %v169, 32
    %v208 = vpop.permute.xlu0 %207
    %209 = vrot.lane.b32.xlu0 %v170, 32
    %v210 = vpop.permute.xlu0 %209
    %211 = vrot.lane.b32.xlu0 %v171, 32
    %v212 = vpop.permute.xlu0 %211
    %213 = vrot.lane.b32.xlu0 %v172, 32
    %v214 = vpop.permute.xlu0 %213
    %215 = vrot.lane.b32.xlu0 %v173, 32
    %v216 = vpop.permute.xlu0 %215
    %217 = vrot.lane.b32.xlu0 %v174, 32
    %v218 = vpop.permute.xlu0 %217
    %219 = vrot.lane.b32.xlu0 %v175, 32
    %v220 = vpop.permute.xlu0 %219
    %221 = vrot.lane.b32.xlu0 %v176, 32
    %v222 = vpop.permute.xlu0 %221
    %223 = vrot.lane.b32.xlu0 %v177, 32
    %v224 = vpop.permute.xlu0 %223
    %225 = vrot.lane.b32.xlu0 %v178, 32
    %v226 = vpop.permute.xlu0 %225
    %vm243 = vcmask 392448
    %244 = vst.msk [vmem:[#allocation5] sm:$0xff] %vm243, %v196
    %vm245 = vcmask 391424
    %246 = vst.msk [vmem:[#allocation5 + $0x8] sm:$0x7f] %vm245, %v198
    %247 = vst.msk [vmem:[#allocation5 + $0x10] sm:$0xff] %vm243, %v200
    %248 = vst.msk [vmem:[#allocation5 + $0x18] sm:$0x7f] %vm245, %v202
    %249 = vst.msk [vmem:[#allocation5 + $0x20] sm:$0xff] %vm243, %v204
    %250 = vst.msk [vmem:[#allocation5 + $0x28] sm:$0x7f] %vm245, %v206
    %251 = vst.msk [vmem:[#allocation5 + $0x30] sm:$0xff] %vm243, %v208
    %252 = vst.msk [vmem:[#allocation5 + $0x38] sm:$0x7f] %vm245, %v210
    %253 = vst.msk [vmem:[#allocation5 + $0x40] sm:$0xff] %vm243, %v212
    %254 = vst.msk [vmem:[#allocation5 + $0x48] sm:$0x7f] %vm245, %v214
    %255 = vst.msk [vmem:[#allocation5 + $0x50] sm:$0xff] %vm243, %v216
    %256 = vst.msk [vmem:[#allocation5 + $0x58] sm:$0x7f] %vm245, %v218
    %257 = vst.msk [vmem:[#allocation5 + $0x60] sm:$0xff] %vm243, %v220
    %258 = vst.msk [vmem:[#allocation5 + $0x68] sm:$0x7f] %vm245, %v222
    %259 = vst.msk [vmem:[#allocation5 + $0x70] sm:$0xff] %vm243, %v224
    %260 = vst.msk [vmem:[#allocation5 + $0x78] sm:$0x7f] %vm245, %v226
    %vm261 = vcmask 385280
    %262 = vst.msk [vmem:[#allocation5 + $0xf] sm:$0x1] %vm261, 0.0
    %263 = vst.msk [vmem:[#allocation5 + $0x1f] sm:$0x1] %vm261, 0.0
    %264 = vst.msk [vmem:[#allocation5 + $0x2f] sm:$0x1] %vm261, 0.0
    %265 = vst.msk [vmem:[#allocation5 + $0x3f] sm:$0x1] %vm261, 0.0
    %266 = vst.msk [vmem:[#allocation5 + $0x4f] sm:$0x1] %vm261, 0.0
    %267 = vst.msk [vmem:[#allocation5 + $0x5f] sm:$0x1] %vm261, 0.0
    %268 = vst.msk [vmem:[#allocation5 + $0x6f] sm:$0x1] %vm261, 0.0
    %269 = vst.msk [vmem:[#allocation5 + $0x7f] sm:$0x1] %vm261, 0.0
    // Predicated region
    $region10: #{tpu_custom_call.1} parent=1 // pred_check
      _
    $region11: #{tpu_custom_call.1} parent=1 // pred_check_branch
      %271 = sbr.rel (0) target = $region13
    $region12: #{tpu_custom_call.1} parent=1 // pred_region
      %s273 = ssub.s32 2048, 2048
      %274 = vsyncadd [#allocation4], %s273
      %s275 = sshll.u32 [#allocation5], 4
      %s276 = int_to_ptr.vmem [resolvable:$true] %s275
      %281 = dma.vmem_to_hbm [thread:$0]  %s276, 2048, %s1, [#allocation4], 128, 128, 8
    $region13: #{tpu_custom_call.1} parent=1 // pred_fallthru
      _
    // Predicated region
    $region14: #{tpu_custom_call.1} parent=1 // pred_check
      _
    $region15: #{tpu_custom_call.1} parent=1 // pred_check_branch
      %283 = sbr.rel (0) target = $region17
    $region16: #{tpu_custom_call.1} parent=1 // pred_region
      %284 = dma.done [#allocation4], 2048
    $region17: #{tpu_custom_call.1} parent=1 // pred_fallthru
      _
    %285 = vsyncpa [#allocation3], 1
    %286 = vsyncpa [#allocation4], 1

</llo_original>
